<compile_context>
chip_gen: v7x
topology: tpu7x:2x2x1
jax: 0.10.0
libtpu: 0.0.40
codegen_flags: <defaults>
</compile_context>

<pallas_src>
import functools

import jax
import jax.numpy as jnp
from jax.experimental import pallas as pl
from jax.experimental.pallas import tpu as pltpu

EPS = 1e-5
D_IN = 200
D_HID = 50


def _round_up(n, m):
    return ((n + m - 1) // m) * m


# ---------------------------------------------------------------------------
# Pass 1: h2 = x @ W12 + b12 (stored, possibly bf16) + per-tile BN statistics
# computed from the f32, bias-free z (so zero-padded rows add exactly 0).
# ---------------------------------------------------------------------------
def _pass1_kernel(x_ref, w12_ref, b12_ref, h2_ref, stats_ref):
    z = jnp.dot(x_ref[...], w12_ref[...],
                preferred_element_type=jnp.float32)              # (tb, 50)  MXU
    h2_ref[...] = (z + b12_ref[...]).astype(h2_ref.dtype)        # narrow store OK
    stats_ref[0:1, :] = jnp.sum(z, axis=0, keepdims=True)        # (1, 50) f32
    stats_ref[1:2, :] = jnp.sum(z * z, axis=0, keepdims=True)    # (1, 50) f32


# ---------------------------------------------------------------------------
# Pass 2: out = h2 @ w_col + b_eff on the (otherwise idle) MXU.  BatchNorm
# (batch stats + affine) and Linear(50,10)->Linear(10,1) are pre-folded into
# w_col / b_eff on the host.
# ---------------------------------------------------------------------------
def _pass2_kernel(h2_ref, w_ref, b_ref, o_ref):
    h2 = h2_ref[...].astype(jnp.float32)
    o_ref[...] = jnp.dot(h2, w_ref[...],
                         preferred_element_type=jnp.float32) + b_ref[...]


def trynet_forward(x, params, *, tile_b=4096, h2_dtype=jnp.bfloat16,
                   input_dtype=None):
    """TryNet forward. x: (B, 200) float32 -> (B, 1) float32."""
    (w1, b1, w2, b2, gamma, beta, w3, b3, w4, b4) = params

    # --- host-side algebraic fusion of adjacent Linears (tiny, once) ---
    w12 = w1 @ w2                        # (200, 50)
    b12 = b1 @ w2 + b2                   # (1, 50)   (kept f32)
    w34 = w3 @ w4                        # (50, 1)
    b34 = b3 @ w4 + b4                   # (1, 1)

    B, k = x.shape
    h = w12.shape[1]

    if input_dtype is not None:          # optional bf16-native MXU feed
        x = x.astype(input_dtype)
        w12 = w12.astype(input_dtype)

    # --- batch tiling: multiples of 16 (bf16-safe); guarantee >= 2 grid tiles
    # when there is enough work so both v7x TensorCores are used. ---
    tile_b = max(16, _round_up(tile_b, 16))
    bmin = _round_up(B, 16)
    half = _round_up(pl.cdiv(bmin, 2), 16) if bmin >= 32 else bmin
    tb = min(tile_b, half)
    bp = _round_up(B, tb)
    if bp != B:                          # zero rows: contribute 0 to the stats
        x = jnp.pad(x, ((0, bp - B), (0, 0)))
    nb = bp // tb

    h2, stats = pl.pallas_call(
        _pass1_kernel,
        grid=(nb,),
        in_specs=[
            pl.BlockSpec((tb, k), lambda i: (i, 0)),          # x tile (streamed)
            pl.BlockSpec((k, h), lambda i: (0, 0)),           # fused W12 (resident)
            pl.BlockSpec((1, h), lambda i: (0, 0)),           # fused b12 (resident)
        ],
        out_specs=[
            pl.BlockSpec((tb, h), lambda i: (i, 0)),          # h2 slab (maybe bf16)
            pl.BlockSpec((None, 2, h), lambda i: (i, 0, 0)),  # per-tile [sum; sumsq]
        ],
        out_shape=(
            jax.ShapeDtypeStruct((bp, h), h2_dtype),
            jax.ShapeDtypeStruct((nb, 2, h), jnp.float32),
        ),
        compiler_params=pltpu.CompilerParams(
            dimension_semantics=("parallel",)),
    )(x, w12, b12)

    # --- tiny host combine: BN batch stats, fold BN affine into the 50->1 tail ---
    # TODO(synk): E[z^2]-E[z]^2 can cancel for strongly off-centered inputs; fine here.
    s1 = jnp.sum(stats[:, 0, :], axis=0, keepdims=True) / B             # E[z]      (1,50)
    mean = s1 + b12.astype(jnp.float32)                                  # E[h2]     (1,50)
    var = jnp.sum(stats[:, 1, :], axis=0, keepdims=True) / B - s1 * s1   # biased var(1,50)
    scale = gamma * jax.lax.rsqrt(var + EPS)                             # (1,50)
    w_col = (scale.T * w34).astype(jnp.float32)                          # (50,1)
    b_eff = ((beta - mean * scale) @ w34 + b34).astype(jnp.float32)      # (1,1)

    out = pl.pallas_call(
        _pass2_kernel,
        grid=(nb,),
        in_specs=[
            pl.BlockSpec((tb, h), lambda i: (i, 0)),          # h2 tile (streamed)
            pl.BlockSpec((h, 1), lambda i: (0, 0)),           # folded tail weights
            pl.BlockSpec((1, 1), lambda i: (0, 0)),           # folded tail bias
        ],
        out_specs=pl.BlockSpec((tb, 1), lambda i: (i, 0)),
        out_shape=jax.ShapeDtypeStruct((bp, 1), jnp.float32),
        compiler_params=pltpu.CompilerParams(
            dimension_semantics=("parallel",)),
    )(h2, w_col, b_eff)

    return out[:B]


def init_params(key):
    """Deterministic parameter init. Linear weights stored as (in, out)."""
    ks = jax.random.split(key, 8)

    def linear(kw, kb, fan_in, fan_out):
        bound = 1.0 / jnp.sqrt(jnp.float32(fan_in))
        w = jax.random.uniform(kw, (fan_in, fan_out), jnp.float32, -bound, bound)
        b = jax.random.uniform(kb, (1, fan_out), jnp.float32, -bound, bound)
        return w, b

    w1, b1 = linear(ks[0], ks[1], 200, 100)
    w2, b2 = linear(ks[2], ks[3], 100, 50)
    gamma = jnp.ones((1, 50), jnp.float32)    # BatchNorm1d weight init
    beta = jnp.zeros((1, 50), jnp.float32)    # BatchNorm1d bias init
    w3, b3 = linear(ks[4], ks[5], 50, 10)
    w4, b4 = linear(ks[6], ks[7], 10, 1)
    return (w1, b1, w2, b2, gamma, beta, w3, b3, w4, b4)


def trynet_reference(x, params):
    """Unfused reference matching the PyTorch module layer-by-layer."""
    (w1, b1, w2, b2, gamma, beta, w3, b3, w4, b4) = params
    h = x @ w1 + b1
    h = h @ w2 + b2
    mean = jnp.mean(h, axis=0, keepdims=True)
    var = jnp.mean((h - mean) ** 2, axis=0, keepdims=True)
    h = (h - mean) / jnp.sqrt(var + EPS) * gamma + beta
    h = h @ w3 + b3
    return h @ w4 + b4


if __name__ == "__main__":
    key = jax.random.PRNGKey(0)
    k_x, k_p = jax.random.split(key)

    B = 200                 # not a tile multiple -> exercises padding + multi-tile grid
    x = jax.random.normal(k_x, (B, D_IN), jnp.float32)
    params = init_params(k_p)
    ref = trynet_reference(x, params)

    # (1) all-f32 path: tight tolerance vs the layer-by-layer reference.
    fwd_f32 = jax.jit(functools.partial(trynet_forward, tile_b=64,
                                        h2_dtype=jnp.float32, input_dtype=None))
    out_f32 = jax.block_until_ready(fwd_f32(x, params))
    assert out_f32.shape == (B, 1)
    assert jnp.allclose(out_f32, ref, atol=2e-4, rtol=2e-4), "f32 path mismatch"

    # (2) default throughput path: bf16 h2 round trip (BN stats stay f32).
    fwd_bf16 = jax.jit(functools.partial(trynet_forward, tile_b=64))
    out_bf16 = jax.block_until_ready(fwd_bf16(x, params))
    assert out_bf16.shape == (B, 1)
    assert jnp.allclose(out_bf16, ref, atol=3e-2, rtol=3e-2), "bf16-h2 path mismatch"

    # (3) optional bf16 MXU feed for x / W12 on top of bf16 h2.
    fwd_bf16_in = jax.jit(functools.partial(trynet_forward, tile_b=64,
                                            input_dtype=jnp.bfloat16))
    out_bf16_in = jax.block_until_ready(fwd_bf16_in(x, params))
    assert out_bf16_in.shape == (B, 1)
    assert jnp.allclose(out_bf16_in, ref, atol=8e-2, rtol=8e-2), "bf16-input path mismatch"

    print("KERNEL_OK")
</pallas_src>

<mosaic_0001>
module attributes {stable_mosaic.version = 11 : i64} {
  func.func @_pass2_kernel(%arg0: i32, %arg1: memref<64x50xf32, #tpu.memory_space<vmem>>, %arg2: memref<50x1xf32, #tpu.memory_space<vmem>>, %arg3: memref<1x1xf32, #tpu.memory_space<vmem>>, %arg4: memref<64x1xf32, #tpu.memory_space<vmem>>) attributes {dimension_semantics = [#tpu.dimension_semantics<parallel>], iteration_bounds = array<i64: 4>, scalar_prefetch = 0 : i64, scratch_operands = 0 : i64, tpu.core_type = #tpu.core_type<tc>, window_params = [{transform_indices = @transform_0, window_bounds = array<i64: 64, 50>}, {pipeline_mode = #tpu.pipeline_mode<synchronous>, transform_indices = @transform_1, window_bounds = array<i64: 50, 1>}, {pipeline_mode = #tpu.pipeline_mode<synchronous>, transform_indices = @transform_2, window_bounds = array<i64: 1, 1>}, {transform_indices = @transform_3, window_bounds = array<i64: 64, 1>}]} {
    %c0 = arith.constant 0 : index
    %c0_0 = arith.constant 0 : index
    %0 = vector.load %arg1[%c0, %c0_0] : memref<64x50xf32, #tpu.memory_space<vmem>>, vector<64x50xf32>
    %c0_1 = arith.constant 0 : index
    %c0_2 = arith.constant 0 : index
    %1 = vector.load %arg2[%c0_1, %c0_2] : memref<50x1xf32, #tpu.memory_space<vmem>>, vector<50x1xf32>
    %cst = arith.constant dense<0.000000e+00> : vector<64x1xf32>
    %2 = tpu.matmul %0, %1, %cst {dimension_numbers = #tpu.dot_dimension_numbers<[1], [0], [0], [1], [0, 0, 1, 1], [], []>} : vector<64x50xf32>, vector<50x1xf32>, vector<64x1xf32> -> vector<64x1xf32>
    %c0_3 = arith.constant 0 : index
    %c0_4 = arith.constant 0 : index
    %3 = vector.load %arg3[%c0_3, %c0_4] : memref<1x1xf32, #tpu.memory_space<vmem>>, vector<1x1xf32>
    %4 = vector.broadcast %3 : vector<1x1xf32> to vector<64x1xf32>
    %5 = arith.addf %2, %4 : vector<64x1xf32>
    %c0_5 = arith.constant 0 : index
    %c0_6 = arith.constant 0 : index
    %6 = vector.load %arg4[%c0_5, %c0_6] : memref<64x1xf32, #tpu.memory_space<vmem>>, vector<64x1xf32>
    tpu.vector_store %arg4[%c0_5, %c0_6], %5 {strides = array<i32>} : memref<64x1xf32, #tpu.memory_space<vmem>>, vector<64x1xf32>,
    return
  }
  func.func @transform_0(%arg0: i32) -> (i32, i32) {
    %c0_i32 = arith.constant 0 : i32
    %c0_i32_0 = arith.constant 0 : i32
    return %arg0, %c0_i32 : i32, i32
  }
  func.func @transform_1(%arg0: i32) -> (i32, i32) {
    %c0_i32 = arith.constant 0 : i32
    %c0_i32_0 = arith.constant 0 : i32
    %c0_i32_1 = arith.constant 0 : i32
    return %c0_i32, %c0_i32_0 : i32, i32
  }
  func.func @transform_2(%arg0: i32) -> (i32, i32) {
    %c0_i32 = arith.constant 0 : i32
    %c0_i32_0 = arith.constant 0 : i32
    %c0_i32_1 = arith.constant 0 : i32
    return %c0_i32, %c0_i32_0 : i32, i32
  }
  func.func @transform_3(%arg0: i32) -> (i32, i32) {
    %c0_i32 = arith.constant 0 : i32
    %c0_i32_0 = arith.constant 0 : i32
    return %arg0, %c0_i32 : i32, i32
  }
}

module attributes {stable_mosaic.version = 11 : i64} {
  func.func @_pass1_kernel(%arg0: i32, %arg1: memref<64x200xf32, #tpu.memory_space<vmem>>, %arg2: memref<200x50xf32, #tpu.memory_space<vmem>>, %arg3: memref<1x50xf32, #tpu.memory_space<vmem>>, %arg4: memref<64x50xf32, #tpu.memory_space<vmem>>, %arg5: memref<1x2x50xf32, #tpu.memory_space<vmem>>) attributes {dimension_semantics = [#tpu.dimension_semantics<parallel>], iteration_bounds = array<i64: 4>, scalar_prefetch = 0 : i64, scratch_operands = 0 : i64, tpu.core_type = #tpu.core_type<tc>, window_params = [{transform_indices = @transform_0, window_bounds = array<i64: 64, 200>}, {pipeline_mode = #tpu.pipeline_mode<synchronous>, transform_indices = @transform_1, window_bounds = array<i64: 200, 50>}, {pipeline_mode = #tpu.pipeline_mode<synchronous>, transform_indices = @transform_2, window_bounds = array<i64: 1, 50>}, {transform_indices = @transform_3, window_bounds = array<i64: 64, 50>}, {transform_indices = @transform_4, window_bounds = array<i64: 1, 2, 50>}]} {
    %c0 = arith.constant 0 : index
    %c0_0 = arith.constant 0 : index
    %0 = vector.load %arg1[%c0, %c0_0] : memref<64x200xf32, #tpu.memory_space<vmem>>, vector<64x200xf32>
    %c0_1 = arith.constant 0 : index
    %c0_2 = arith.constant 0 : index
    %1 = vector.load %arg2[%c0_1, %c0_2] : memref<200x50xf32, #tpu.memory_space<vmem>>, vector<200x50xf32>
    %cst = arith.constant dense<0.000000e+00> : vector<64x50xf32>
    %2 = tpu.matmul %0, %1, %cst {dimension_numbers = #tpu.dot_dimension_numbers<[1], [0], [0], [1], [0, 0, 1, 1], [], []>} : vector<64x200xf32>, vector<200x50xf32>, vector<64x50xf32> -> vector<64x50xf32>
    %c0_3 = arith.constant 0 : index
    %c0_4 = arith.constant 0 : index
    %3 = vector.load %arg3[%c0_3, %c0_4] : memref<1x50xf32, #tpu.memory_space<vmem>>, vector<1x50xf32>
    %4 = vector.broadcast %3 : vector<1x50xf32> to vector<64x50xf32>
    %5 = arith.addf %2, %4 : vector<64x50xf32>
    %c0_5 = arith.constant 0 : index
    %c0_6 = arith.constant 0 : index
    %6 = vector.load %arg4[%c0_5, %c0_6] : memref<64x50xf32, #tpu.memory_space<vmem>>, vector<64x50xf32>
    tpu.vector_store %arg4[%c0_5, %c0_6], %5 {strides = array<i32>} : memref<64x50xf32, #tpu.memory_space<vmem>>, vector<64x50xf32>,
    %cst_7 = arith.constant dense<0.000000e+00> : vector<50xf32>
    %7 = vector.multi_reduction <add>, %2, %cst_7 [0] : vector<64x50xf32> to vector<50xf32>
    %8 = vector.shape_cast %7 : vector<50xf32> to vector<1x50xf32>
    %c0_8 = arith.constant 0 : index
    %c0_9 = arith.constant 0 : index
    %c0_10 = arith.constant 0 : index
    %9 = vector.load %arg5[%c0_8, %c0_9, %c0_10] : memref<1x2x50xf32, #tpu.memory_space<vmem>>, vector<1x1x50xf32>
    %10 = vector.shape_cast %9 : vector<1x1x50xf32> to vector<1x50xf32>
    %11 = vector.shape_cast %8 : vector<1x50xf32> to vector<1x1x50xf32>
    tpu.vector_store %arg5[%c0_8, %c0_9, %c0_10], %11 {strides = array<i32>} : memref<1x2x50xf32, #tpu.memory_space<vmem>>, vector<1x1x50xf32>,
    %12 = arith.mulf %2, %2 : vector<64x50xf32>
    %cst_11 = arith.constant dense<0.000000e+00> : vector<50xf32>
    %13 = vector.multi_reduction <add>, %12, %cst_11 [0] : vector<64x50xf32> to vector<50xf32>
    %14 = vector.shape_cast %13 : vector<50xf32> to vector<1x50xf32>
    %c0_12 = arith.constant 0 : index
    %c1 = arith.constant 1 : index
    %c0_13 = arith.constant 0 : index
    %15 = vector.load %arg5[%c0_12, %c1, %c0_13] : memref<1x2x50xf32, #tpu.memory_space<vmem>>, vector<1x1x50xf32>
    %16 = vector.shape_cast %15 : vector<1x1x50xf32> to vector<1x50xf32>
    %17 = vector.shape_cast %14 : vector<1x50xf32> to vector<1x1x50xf32>
    tpu.vector_store %arg5[%c0_12, %c1, %c0_13], %17 {strides = array<i32>} : memref<1x2x50xf32, #tpu.memory_space<vmem>>, vector<1x1x50xf32>,
    return
  }
  func.func @transform_0(%arg0: i32) -> (i32, i32) {
    %c0_i32 = arith.constant 0 : i32
    %c0_i32_0 = arith.constant 0 : i32
    return %arg0, %c0_i32 : i32, i32
  }
  func.func @transform_1(%arg0: i32) -> (i32, i32) {
    %c0_i32 = arith.constant 0 : i32
    %c0_i32_0 = arith.constant 0 : i32
    %c0_i32_1 = arith.constant 0 : i32
    return %c0_i32, %c0_i32_0 : i32, i32
  }
  func.func @transform_2(%arg0: i32) -> (i32, i32) {
    %c0_i32 = arith.constant 0 : i32
    %c0_i32_0 = arith.constant 0 : i32
    %c0_i32_1 = arith.constant 0 : i32
    return %c0_i32, %c0_i32_0 : i32, i32
  }
  func.func @transform_3(%arg0: i32) -> (i32, i32) {
    %c0_i32 = arith.constant 0 : i32
    %c0_i32_0 = arith.constant 0 : i32
    return %arg0, %c0_i32 : i32, i32
  }
  func.func @transform_4(%arg0: i32) -> (i32, i32, i32) {
    %c0_i32 = arith.constant 0 : i32
    %c0_i32_0 = arith.constant 0 : i32
    %c0_i32_1 = arith.constant 0 : i32
    return %arg0, %c0_i32, %c0_i32_0 : i32, i32, i32
  }
}

</mosaic_0001>

<llo_original>
// kernel: trynet_forward.2
$region0: #{trynet_forward.2}
  #allocation0 [shape = 'u32[]', space=smem, size = 0x4, offset = 0x4, fixed_abs, tag = 'smem constant byte address 0x4 - core index']
  #allocation1 [shape = 'u32[144,128]{1,0:T(1,128)}', space=vmem, size = 0x12000, scoped, tag = 'internal scratch']
  %s0 = inlined_call_operand.vmem [shape: f32[256,200], index: 0, kind: input, shape index: {}]
  %s1 = inlined_call_operand.vmem [shape: f32[200,50], index: 1, kind: input, shape index: {}]
  %s2 = inlined_call_operand.vmem [shape: f32[1,50], index: 2, kind: input, shape index: {}]
  %s3 = inlined_call_operand.vmem [shape: f32[256,50], index: 3, kind: output, shape index: {0}]
  %s4 = inlined_call_operand.vmem [shape: f32[4,2,50], index: 4, kind: output, shape index: {1}]
  %5 = xla_tuple %s3, %s4
  %s6 = sld [smem:[#allocation0]]
  $region53: #{trynet_forward.2} parent=0
    _
  %s8 = ssub.s32 1, %s6
  %s9 = scalar_select 0, %s8, %s6
  loop: start=0, step=1, limit=6
  $region2: #{trynet_forward.2} parent=0 // loop_pre_header
    _
  $region3: #{trynet_forward.2} parent=0 // loop_header
    %s11 = sphi 0, %s15
    %p12 = scmp.ge.s32.totalorder %s11, 6
    %s21 = sphi 0, %s23
    %s24 = sphi 0, %s21
    %s25 = sphi 0, %s24
    %s41 = sphi 0, %s25
    %s45 = sphi 0, %s45
    %s47 = sphi 0, %s45
    %s48 = sphi 0, %s47
    %s62 = sphi 0, %s48
    %s66 = sphi 0, %s66
    %s68 = sphi 0, %s66
    %s69 = sphi 0, %s68
    %s83 = sphi 0, %s69
    %s89 = sphi 0, %s91
    %s92 = sphi 0, %s89
    %s93 = sphi 0, %s92
    %s109 = sphi 0, %s93
    %s115 = sphi 0, %s117
    %s118 = sphi 0, %s115
    %s119 = sphi 0, %s118
    %s135 = sphi 0, %s119
  $region4: #{trynet_forward.2} parent=0 // loop_header_branch
    %14 = sbr.rel (%p12) target = $region8
  $region5: #{trynet_forward.2} parent=0 // loop_body
    %s16 = ssub.s32 %s11, 1
    %s17 = ssub.s32 %s11, 2
    %s18 = sadd.s32 %s11, 1
    %s19 = ssub.s32 %s11, %s18
    %p20 = scmp.eq.s32.totalorder %s19, 0
    %s22 = sadd.s32 %s21, 1
    %s23 = scalar_select %p20, %s21, %s22
    %p26 = pneg %p20
    %p27 = scmp.eq.s32.totalorder %s11, 3
    %p28 = por %p26, %p27
    %p29 = scmp.ne.s32.totalorder %s21, %s24
    %p30 = scmp.eq.s32.totalorder %s11, 0
    %p31 = por %p29, %p30
    %p32 = scmp.ne.s32.totalorder %s21, %s24
    %p33 = scmp.eq.s32.totalorder %s16, 3
    %p34 = por %p32, %p33
    %p35 = scmp.ne.s32.totalorder %s24, %s25
    %p36 = scmp.eq.s32.totalorder %s16, 0
    %p37 = por %p35, %p36
    %p38 = scmp.ne.s32.totalorder %s24, %s25
    %p39 = scmp.eq.s32.totalorder %s17, 3
    %p40 = por %p38, %p39
    %p42 = scmp.ne.s32.totalorder %s25, %s41
    %p43 = scmp.eq.s32.totalorder %s17, 0
    %p44 = por %p42, %p43
    %s46 = sadd.s32 %s45, 1
    %p49 = scmp.eq.s32.totalorder %s11, 3
    %p50 = scmp.ne.s32.totalorder %s45, %s47
    %p51 = scmp.eq.s32.totalorder %s11, 0
    %p52 = por %p50, %p51
    %p53 = scmp.ne.s32.totalorder %s45, %s47
    %p54 = scmp.eq.s32.totalorder %s16, 3
    %p55 = por %p53, %p54
    %p56 = scmp.ne.s32.totalorder %s47, %s48
    %p57 = scmp.eq.s32.totalorder %s16, 0
    %p58 = por %p56, %p57
    %p59 = scmp.ne.s32.totalorder %s47, %s48
    %p60 = scmp.eq.s32.totalorder %s17, 3
    %p61 = por %p59, %p60
    %p63 = scmp.ne.s32.totalorder %s48, %s62
    %p64 = scmp.eq.s32.totalorder %s17, 0
    %p65 = por %p63, %p64
    %s67 = sadd.s32 %s66, 1
    %p70 = scmp.eq.s32.totalorder %s11, 3
    %p71 = scmp.ne.s32.totalorder %s66, %s68
    %p72 = scmp.eq.s32.totalorder %s11, 0
    %p73 = por %p71, %p72
    %p74 = scmp.ne.s32.totalorder %s66, %s68
    %p75 = scmp.eq.s32.totalorder %s16, 3
    %p76 = por %p74, %p75
    %p77 = scmp.ne.s32.totalorder %s68, %s69
    %p78 = scmp.eq.s32.totalorder %s16, 0
    %p79 = por %p77, %p78
    %p80 = scmp.ne.s32.totalorder %s68, %s69
    %p81 = scmp.eq.s32.totalorder %s17, 3
    %p82 = por %p80, %p81
    %p84 = scmp.ne.s32.totalorder %s69, %s83
    %p85 = scmp.eq.s32.totalorder %s17, 0
    %p86 = por %p84, %p85
    %s87 = ssub.s32 %s11, %s18
    %p88 = scmp.eq.s32.totalorder %s87, 0
    %s90 = sadd.s32 %s89, 1
    %s91 = scalar_select %p88, %s89, %s90
    %p94 = pneg %p88
    %p95 = scmp.eq.s32.totalorder %s11, 3
    %p96 = por %p94, %p95
    %p97 = scmp.ne.s32.totalorder %s89, %s92
    %p98 = scmp.eq.s32.totalorder %s11, 0
    %p99 = por %p97, %p98
    %p100 = scmp.ne.s32.totalorder %s89, %s92
    %p101 = scmp.eq.s32.totalorder %s16, 3
    %p102 = por %p100, %p101
    %p103 = scmp.ne.s32.totalorder %s92, %s93
    %p104 = scmp.eq.s32.totalorder %s16, 0
    %p105 = por %p103, %p104
    %p106 = scmp.ne.s32.totalorder %s92, %s93
    %p107 = scmp.eq.s32.totalorder %s17, 3
    %p108 = por %p106, %p107
    %p110 = scmp.ne.s32.totalorder %s93, %s109
    %p111 = scmp.eq.s32.totalorder %s17, 0
    %p112 = por %p110, %p111
    %s113 = ssub.s32 %s11, %s18
    %p114 = scmp.eq.s32.totalorder %s113, 0
    %s116 = sadd.s32 %s115, 1
    %s117 = scalar_select %p114, %s115, %s116
    %p120 = pneg %p114
    %p121 = scmp.eq.s32.totalorder %s11, 3
    %p122 = por %p120, %p121
    %p123 = scmp.ne.s32.totalorder %s115, %s118
    %p124 = scmp.eq.s32.totalorder %s11, 0
    %p125 = por %p123, %p124
    %p126 = scmp.ne.s32.totalorder %s115, %s118
    %p127 = scmp.eq.s32.totalorder %s16, 3
    %p128 = por %p126, %p127
    %p129 = scmp.ne.s32.totalorder %s118, %s119
    %p130 = scmp.eq.s32.totalorder %s16, 0
    %p131 = por %p129, %p130
    %p132 = scmp.ne.s32.totalorder %s118, %s119
    %p133 = scmp.eq.s32.totalorder %s17, 3
    %p134 = por %p132, %p133
    %p136 = scmp.ne.s32.totalorder %s119, %s135
    %p137 = scmp.eq.s32.totalorder %s17, 0
    %p138 = por %p136, %p137
    %p139 = scmp.le.s32.totalorder 1, %s11
    %p140 = scmp.lt.s32.totalorder %s11, 5
    %p141 = pnand %p139, %p140
    %p142 = pneg %p141
    // Predicated region
    $region9: #{trynet_forward.2} parent=5 // pred_check
      _
    $region10: #{trynet_forward.2} parent=5 // pred_check_branch
      %144 = sbr.rel (%p141) target = $region12
    $region11: #{trynet_forward.2} parent=5 // pred_region
      %s145 = ssub.s32 %s11, 1
      // Predicated region
      $region13: #{trynet_forward.2} parent=11 // pred_check
        %p146 = pneg %p58
      $region14: #{trynet_forward.2} parent=11 // pred_check_branch
        %148 = sbr.rel (%p146) target = $region16
      $region15: #{trynet_forward.2} parent=11 // pred_region
        _
      $region16: #{trynet_forward.2} parent=11 // pred_fallthru
        _
      // Predicated region
      $region17: #{trynet_forward.2} parent=11 // pred_check
        %p149 = pneg %p79
      $region18: #{trynet_forward.2} parent=11 // pred_check_branch
        %151 = sbr.rel (%p149) target = $region20
      $region19: #{trynet_forward.2} parent=11 // pred_region
        _
      $region20: #{trynet_forward.2} parent=11 // pred_fallthru
        _
    $region12: #{trynet_forward.2} parent=5 // pred_fallthru
      _
    %p152 = scmp.lt.s32.totalorder %s11, 4
    // Predicated region
    $region21: #{trynet_forward.2} parent=5 // pred_check
      %p153 = pneg %p152
    $region22: #{trynet_forward.2} parent=5 // pred_check_branch
      %155 = sbr.rel (%p153) target = $region24
    $region23: #{trynet_forward.2} parent=5 // pred_region
      // Predicated region
      $region25: #{trynet_forward.2} parent=23 // pred_check
        %p156 = pneg %p31
      $region26: #{trynet_forward.2} parent=23 // pred_check_branch
        %158 = sbr.rel (%p156) target = $region28
      $region27: #{trynet_forward.2} parent=23 // pred_region
        %s159 = smul.u32 8, %s11
        %p160 = scmp.lt.s32.totalorder %s159, 31
        %s161 = scalar_select %p160, %s159, 31
        %s162 = smul.addr %s161, 2
        %s163 = smul.addr %s162, 8
        %s164 = scalar_lea.vmem %s0, %s163
        %s165 = smul.u32 8, %s11
      $region28: #{trynet_forward.2} parent=23 // pred_fallthru
        _
    $region24: #{trynet_forward.2} parent=5 // pred_fallthru
      _
    %p166 = scmp.le.s32.totalorder 1, %s11
    %p167 = scmp.lt.s32.totalorder %s11, 5
    %p168 = pnand %p166, %p167
    %p169 = pneg %p168
    // Predicated region
    $region29: #{trynet_forward.2} parent=5 // pred_check
      _
    $region30: #{trynet_forward.2} parent=5 // pred_check_branch
      %171 = sbr.rel (%p168) target = $region32
    $region31: #{trynet_forward.2} parent=5 // pred_region
      %s172 = ssub.s32 %s11, 1
      %s173 = smul.u32 8, %s16
      %p174 = scmp.lt.s32.totalorder %s173, 31
      %s175 = scalar_select %p174, %s173, 31
      %s176 = smul.addr %s175, 2
      %s177 = smul.addr %s176, 8
      %s178 = scalar_lea.vmem %s0, %s177
      %p179 = pneg %p37
      %p180 = pneg %p34
      %p181 = pneg %p58
      %p182 = pneg %p55
      %p183 = pneg %p79
      %p184 = pneg %p76
      %p185 = pneg %p105
      %p186 = pneg %p102
      %s187 = smul.u32 8, %s16
      %p188 = scmp.lt.s32.totalorder %s187, 31
      %s189 = scalar_select %p188, %s187, 31
      %s190 = smul.addr %s189, 8
      %s191 = scalar_lea.vmem %s3, %s190
      %p192 = pneg %p131
      %p193 = pneg %p128
      %p194 = scmp.lt.s32.totalorder %s16, 3
      %s195 = scalar_select %p194, %s16, 3
      %s196 = smul.addr %s195, 2
      %s197 = scalar_lea.vmem %s4, %s196
      %s198 = smul.u32 8, %s16
      %p199 = scmp.lt.s32.totalorder %s198, 31
      %s200 = scalar_select %p199, %s198, 31
      %s201 = smul.addr %s200, 2
      %s202 = smul.addr %s201, 8
      %s203 = scalar_lea.vmem %s0, %s202
      %s204 = smul.u32 8, %s16
      %s205 = smul.u32 8, %s16
      %p206 = scmp.lt.s32.totalorder %s205, 31
      %s207 = scalar_select %p206, %s205, 31
      %s208 = smul.addr %s207, 8
      %s209 = scalar_lea.vmem %s3, %s208
      %s210 = smul.u32 8, %s16
      %p211 = scmp.lt.s32.totalorder %s16, 3
      %s212 = scalar_select %p211, %s16, 3
      %s213 = smul.addr %s212, 2
      %s214 = scalar_lea.vmem %s4, %s213
      %v215 = vld [vmem:[%s203] sm:$0xff]
      %v216 = vld [vmem:[%s203 + $0x8] sm:$0xff]
      %v217 = vld [vmem:[%s203 + $0x10] sm:$0xff]
      %v218 = vld [vmem:[%s203 + $0x18] sm:$0xff]
      %v219 = vld [vmem:[%s203 + $0x20] sm:$0xff]
      %v220 = vld [vmem:[%s203 + $0x28] sm:$0xff]
      %v221 = vld [vmem:[%s203 + $0x30] sm:$0xff]
      %v222 = vld [vmem:[%s203 + $0x38] sm:$0xff]
      %v223 = vld [vmem:[%s203 + $0x40] sm:$0xff]
      %v224 = vld [vmem:[%s203 + $0x48] sm:$0xff]
      %v225 = vld [vmem:[%s203 + $0x50] sm:$0xff]
      %v226 = vld [vmem:[%s203 + $0x58] sm:$0xff]
      %v227 = vld [vmem:[%s203 + $0x60] sm:$0xff]
      %v228 = vld [vmem:[%s203 + $0x68] sm:$0xff]
      %v229 = vld [vmem:[%s203 + $0x70] sm:$0xff]
      %v230 = vld [vmem:[%s203 + $0x78] sm:$0xff]
      %v231 = vld [vmem:[%s1] sm:$0xff]
      %v232 = vld [vmem:[%s1 + $0x8] sm:$0xff]
      %v233 = vld [vmem:[%s1 + $0x10] sm:$0xff]
      %v234 = vld [vmem:[%s1 + $0x18] sm:$0xff]
      %v235 = vld [vmem:[%s1 + $0x20] sm:$0xff]
      %v236 = vld [vmem:[%s1 + $0x28] sm:$0xff]
      %v237 = vld [vmem:[%s1 + $0x30] sm:$0xff]
      %v238 = vld [vmem:[%s1 + $0x38] sm:$0xff]
      %v239 = vld [vmem:[%s1 + $0x40] sm:$0xff]
      %v240 = vld [vmem:[%s1 + $0x48] sm:$0xff]
      %v241 = vld [vmem:[%s1 + $0x50] sm:$0xff]
      %v242 = vld [vmem:[%s1 + $0x58] sm:$0xff]
      %v243 = vld [vmem:[%s1 + $0x60] sm:$0xff]
      %v244 = vld [vmem:[%s1 + $0x68] sm:$0xff]
      %v245 = vld [vmem:[%s1 + $0x70] sm:$0xff]
      %v246 = vld [vmem:[%s1 + $0x78] sm:$0xff]
      %v247 = vld [vmem:[%s1 + $0x80] sm:$0xff]
      %v248 = vld [vmem:[%s1 + $0x88] sm:$0xff]
      %v249 = vld [vmem:[%s1 + $0x90] sm:$0xff]
      %v250 = vld [vmem:[%s1 + $0x98] sm:$0xff]
      %v251 = vld [vmem:[%s1 + $0xa0] sm:$0xff]
      %v252 = vld [vmem:[%s1 + $0xa8] sm:$0xff]
      %v253 = vld [vmem:[%s1 + $0xb0] sm:$0xff]
      %v254 = vld [vmem:[%s1 + $0xb8] sm:$0xff]
      %v255 = vld [vmem:[%s1 + $0xc0] sm:$0xff]
      %vm256 = vcmask 588800
      %v258 = vsel %vm256, %v216, 0
      %v261 = vsel %vm256, %v218, 0
      %v264 = vsel %vm256, %v220, 0
      %v267 = vsel %vm256, %v222, 0
      %v270 = vsel %vm256, %v224, 0
      %v273 = vsel %vm256, %v226, 0
      %v276 = vsel %vm256, %v228, 0
      %v279 = vsel %vm256, %v230, 0
      %281 = vmatprep.subr.mxu0 0.0
      %282 = vmatpush1.msra.mxu0 %v231
      %283 = vmatprep.subr.mxu0 0.0
      %284 = vmatpush1.msra.mxu0 %v232
      %285 = vmatprep.subr.mxu0 0.0
      %286 = vmatpush1.msra.mxu0 %v233
      %287 = vmatprep.subr.mxu0 0.0
      %288 = vmatpush1.msra.mxu0 %v234
      %289 = vmatprep.subr.mxu0 0.0
      %290 = vmatpush1.msra.mxu0 %v235
      %291 = vmatprep.subr.mxu0 0.0
      %292 = vmatpush1.msra.mxu0 %v236
      %293 = vmatprep.subr.mxu0 0.0
      %294 = vmatpush1.msra.mxu0 %v237
      %295 = vmatprep.subr.mxu0 0.0
      %296 = vmatpush1.msra.mxu0 %v238
      %297 = vmatprep.subr.mxu0 0.0
      %298 = vmatpush1.msra.mxu0 %v239
      %299 = vmatprep.subr.mxu0 0.0
      %300 = vmatpush1.msra.mxu0 %v240
      %301 = vmatprep.subr.mxu0 0.0
      %302 = vmatpush1.msra.mxu0 %v241
      %303 = vmatprep.subr.mxu0 0.0
      %304 = vmatpush1.msra.mxu0 %v242
      %305 = vmatprep.subr.mxu0 0.0
      %306 = vmatpush1.msra.mxu0 %v243
      %307 = vmatprep.subr.mxu0 0.0
      %308 = vmatpush1.msra.mxu0 %v244
      %309 = vmatprep.subr.mxu0 0.0
      %310 = vmatpush1.msra.mxu0 %v245
      %311 = vmatprep.subr.mxu0 0.0
      %312 = vmatpush1.msra.mxu0 %v246
      %313 = vmatprep.subr.mxu0 0.0
      %314 = vmatpush1.msra.mxu0 %v247
      %315 = vmatprep.subr.mxu0 0.0
      %316 = vmatpush1.msra.mxu0 %v248
      %317 = vmatprep.subr.mxu0 0.0
      %318 = vmatpush1.msra.mxu0 %v249
      %319 = vmatprep.subr.mxu0 0.0
      %320 = vmatpush1.msra.mxu0 %v250
      %321 = vmatprep.subr.mxu0 0.0
      %322 = vmatpush1.msra.mxu0 %v251
      %323 = vmatprep.subr.mxu0 0.0
      %324 = vmatpush1.msra.mxu0 %v252
      %325 = vmatprep.subr.mxu0 0.0
      %326 = vmatpush1.msra.mxu0 %v253
      %327 = vmatprep.subr.mxu0 0.0
      %328 = vmatpush1.msra.mxu0 %v254
      %329 = vmatprep.subr.mxu0 0.0
      %330 = vmatpush1.msra.mxu0 %v255
      %331 = vmatprep.subr.mxu0 0.0
      %332 = vmatpush1.msra.mxu0 0.0
      %333 = vmatprep.subr.mxu0 0.0
      %334 = vmatpush1.msra.mxu0 0.0
      %335 = vmatprep.subr.mxu0 0.0
      %336 = vmatpush1.msra.mxu0 0.0
      %337 = vmatprep.subr.mxu0 0.0
      %338 = vmatpush1.msra.mxu0 0.0
      %339 = vmatprep.subr.mxu0 0.0
      %340 = vmatpush1.msra.mxu0 0.0
      %341 = vmatprep.subr.mxu0 0.0
      %342 = vmatpush1.msra.mxu0 0.0
      %343 = vmatprep.subr.mxu0 0.0
      %344 = vmatpush1.msra.mxu0 0.0
      %345 = vmatprep.mubr.f32.mxu0 %v258
      %346 = vmatmul.mubr.f32.gmra.mrb[0].mxu0 %v215
      %v347 = vpop.f32.mrb[0].mxu0
      %v348 = vadd.f32 0.0, %v347
      %v349 = vpop.f32.mrb[0].mxu0
      %350 = vmatprep.mubr.f32.mxu0 %v261
      %351 = vmatmul.mubr.f32.gmra.mrb[0].mxu0 %v217
      %v352 = vpop.f32.mrb[0].mxu0
      %v353 = vadd.f32 0.0, %v352
      %v354 = vpop.f32.mrb[0].mxu0
      %355 = vmatprep.mubr.f32.mxu0 %v264
      %356 = vmatmul.mubr.f32.gmra.mrb[0].mxu0 %v219
      %v357 = vpop.f32.mrb[0].mxu0
      %v358 = vadd.f32 0.0, %v357
      %v359 = vpop.f32.mrb[0].mxu0
      %360 = vmatprep.mubr.f32.mxu0 %v267
      %361 = vmatmul.mubr.f32.gmra.mrb[0].mxu0 %v221
      %v362 = vpop.f32.mrb[0].mxu0
      %v363 = vadd.f32 0.0, %v362
      %v364 = vpop.f32.mrb[0].mxu0
      %365 = vmatprep.mubr.f32.mxu0 %v270
      %366 = vmatmul.mubr.f32.gmra.mrb[0].mxu0 %v223
      %v367 = vpop.f32.mrb[0].mxu0
      %v368 = vadd.f32 0.0, %v367
      %v369 = vpop.f32.mrb[0].mxu0
      %370 = vmatprep.mubr.f32.mxu0 %v273
      %371 = vmatmul.mubr.f32.gmra.mrb[0].mxu0 %v225
      %v372 = vpop.f32.mrb[0].mxu0
      %v373 = vadd.f32 0.0, %v372
      %v374 = vpop.f32.mrb[0].mxu0
      %375 = vmatprep.mubr.f32.mxu0 %v276
      %376 = vmatmul.mubr.f32.gmra.mrb[0].mxu0 %v227
      %v377 = vpop.f32.mrb[0].mxu0
      %v378 = vadd.f32 0.0, %v377
      %v379 = vpop.f32.mrb[0].mxu0
      %380 = vmatprep.mubr.f32.mxu0 %v279
      %381 = vmatmul.mubr.f32.gmra.mrb[0].mxu0 %v229
      %v382 = vpop.f32.mrb[0].mxu0
      %v383 = vadd.f32 0.0, %v382
      %v384 = vpop.f32.mrb[0].mxu0
      %385 = vdwg.mxu0
      %v386 = vld [vmem:[%s2] sm:$0x1]
      %v388 = vlaneseq
      %v389 = vshrl.u32 %v388, 7
      %v390 = vsub.s32 0, %v389
      %v391 = vrot.slane %v386, %v390
      %v393 = vadd.f32 %v348, %v391
      %v394 = vadd.f32 %v353, %v391
      %v395 = vadd.f32 %v358, %v391
      %v396 = vadd.f32 %v363, %v391
      %v397 = vadd.f32 %v368, %v391
      %v398 = vadd.f32 %v373, %v391
      %v399 = vadd.f32 %v378, %v391
      %v400 = vadd.f32 %v383, %v391
      %vm401 = vcmask 408576
      %402 = vst.msk [vmem:[%s209] sm:$0xff] %vm401, %v393
      %403 = vst.msk [vmem:[%s209 + $0x8] sm:$0xff] %vm401, %v394
      %404 = vst.msk [vmem:[%s209 + $0x10] sm:$0xff] %vm401, %v395
      %405 = vst.msk [vmem:[%s209 + $0x18] sm:$0xff] %vm401, %v396
      %406 = vst.msk [vmem:[%s209 + $0x20] sm:$0xff] %vm401, %v397
      %407 = vst.msk [vmem:[%s209 + $0x28] sm:$0xff] %vm401, %v398
      %408 = vst.msk [vmem:[%s209 + $0x30] sm:$0xff] %vm401, %v399
      %409 = vst.msk [vmem:[%s209 + $0x38] sm:$0xff] %vm401, %v400
      %v410 = vsel %vm401, %v348, 0.0
      %v411 = vsel %vm401, %v353, 0.0
      %v412 = vadd.f32 %v410, %v411
      %v413 = vsel %vm401, %v358, 0.0
      %v414 = vadd.f32 %v412, %v413
      %v415 = vsel %vm401, %v363, 0.0
      %v416 = vadd.f32 %v414, %v415
      %v417 = vsel %vm401, %v368, 0.0
      %v418 = vadd.f32 %v416, %v417
      %v419 = vsel %vm401, %v373, 0.0
      %v420 = vadd.f32 %v418, %v419
      %v421 = vsel %vm401, %v378, 0.0
      %v422 = vadd.f32 %v420, %v421
      %v423 = vsel %vm401, %v383, 0.0
      %v424 = vadd.f32 %v422, %v423
      %v425 = vrot.slane %v424, 4
      %v426 = vadd.f32 %v424, %v425
      %v427 = vrot.slane %v426, 2
      %v428 = vadd.f32 %v426, %v427
      %v429 = vrot.slane %v428, 1
      %v430 = vadd.f32 %v428, %v429
      %vm431 = vcmask 401408
      %432 = vst.msk [vmem:[%s214] sm:$0x1] %vm431, %v430
      %v433 = vmul.f32 %v348, %v348
      %v434 = vmul.f32 %v353, %v353
      %v435 = vmul.f32 %v358, %v358
      %v436 = vmul.f32 %v363, %v363
      %v437 = vmul.f32 %v368, %v368
      %v438 = vmul.f32 %v373, %v373
      %v439 = vmul.f32 %v378, %v378
      %v440 = vmul.f32 %v383, %v383
      %v441 = vsel %vm401, %v433, 0.0
      %v442 = vsel %vm401, %v434, 0.0
      %v443 = vadd.f32 %v441, %v442
      %v444 = vsel %vm401, %v435, 0.0
      %v445 = vadd.f32 %v443, %v444
      %v446 = vsel %vm401, %v436, 0.0
      %v447 = vadd.f32 %v445, %v446
      %v448 = vsel %vm401, %v437, 0.0
      %v449 = vadd.f32 %v447, %v448
      %v450 = vsel %vm401, %v438, 0.0
      %v451 = vadd.f32 %v449, %v450
      %v452 = vsel %vm401, %v439, 0.0
      %v453 = vadd.f32 %v451, %v452
      %v454 = vsel %vm401, %v440, 0.0
      %v455 = vadd.f32 %v453, %v454
      %v456 = vrot.slane %v455, 4
      %v457 = vadd.f32 %v455, %v456
      %v458 = vrot.slane %v457, 2
      %v459 = vadd.f32 %v457, %v458
      %v460 = vrot.slane %v459, 1
      %v461 = vadd.f32 %v459, %v460
      %462 = vst.msk [vmem:[%s214 + $0x1] sm:$0x1] %vm431, %v461
      %s463 = smul.u32 8, %s16
      %p464 = scmp.lt.s32.totalorder %s463, 31
      %s465 = scalar_select %p464, %s463, 31
      %s466 = smul.addr %s465, 8
      %s467 = scalar_lea.vmem %s3, %s466
      %p468 = scmp.lt.s32.totalorder %s16, 3
      %s469 = scalar_select %p468, %s16, 3
      %s470 = smul.addr %s469, 2
      %s471 = scalar_lea.vmem %s4, %s470
      // Predicated region
      $region33: #{trynet_forward.2} parent=31 // pred_check
        %p472 = pneg %p102
      $region34: #{trynet_forward.2} parent=31 // pred_check_branch
        %474 = sbr.rel (%p472) target = $region36
      $region35: #{trynet_forward.2} parent=31 // pred_region
        %s475 = smul.u32 8, %s16
      $region36: #{trynet_forward.2} parent=31 // pred_fallthru
        _
      // Predicated region
      $region37: #{trynet_forward.2} parent=31 // pred_check
        %p476 = pneg %p128
      $region38: #{trynet_forward.2} parent=31 // pred_check_branch
        %478 = sbr.rel (%p476) target = $region40
      $region39: #{trynet_forward.2} parent=31 // pred_region
        _
      $region40: #{trynet_forward.2} parent=31 // pred_fallthru
        _
    $region32: #{trynet_forward.2} parent=5 // pred_fallthru
      _
    %p479 = scmp.le.s32.totalorder 2, %s11
    // Predicated region
    $region41: #{trynet_forward.2} parent=5 // pred_check
      %p480 = pneg %p479
    $region42: #{trynet_forward.2} parent=5 // pred_check_branch
      %482 = sbr.rel (%p480) target = $region44
    $region43: #{trynet_forward.2} parent=5 // pred_region
      %s483 = ssub.s32 %s11, 2
      // Predicated region
      $region45: #{trynet_forward.2} parent=43 // pred_check
        %p484 = pneg %p108
      $region46: #{trynet_forward.2} parent=43 // pred_check_branch
        %486 = sbr.rel (%p484) target = $region48
      $region47: #{trynet_forward.2} parent=43 // pred_region
        %s487 = smul.u32 8, %s17
        %p488 = scmp.lt.s32.totalorder %s487, 31
        %s489 = scalar_select %p488, %s487, 31
        %s490 = smul.addr %s489, 8
        %s491 = scalar_lea.vmem %s3, %s490
      $region48: #{trynet_forward.2} parent=43 // pred_fallthru
        _
      // Predicated region
      $region49: #{trynet_forward.2} parent=43 // pred_check
        %p492 = pneg %p134
      $region50: #{trynet_forward.2} parent=43 // pred_check_branch
        %494 = sbr.rel (%p492) target = $region52
      $region51: #{trynet_forward.2} parent=43 // pred_region
        %p495 = scmp.lt.s32.totalorder %s17, 3
        %s496 = scalar_select %p495, %s17, 3
        %s497 = smul.addr %s496, 2
        %s498 = scalar_lea.vmem %s4, %s497
      $region52: #{trynet_forward.2} parent=43 // pred_fallthru
        _
    $region44: #{trynet_forward.2} parent=5 // pred_fallthru
      _
  $region6: #{trynet_forward.2} parent=0 // loop_footer
    %s15 = sadd.s32 1, %s11
  $region7: #{trynet_forward.2} parent=0 // loop_footer_branch
    %10 = sbr.rel target = $region3
  $region8: #{trynet_forward.2} parent=0 // loop_exit
    _

// kernel: trynet_forward.3
$region0: #{trynet_forward.3}
  #allocation0 [shape = 'u32[]', space=smem, size = 0x4, offset = 0x4, fixed_abs, tag = 'smem constant byte address 0x4 - core index']
  #allocation1 [shape = 'u32[144,128]{1,0:T(1,128)}', space=vmem, size = 0x12000, scoped, tag = 'internal scratch']
  #allocation2 [shape = 'f32[1,1]{1,0:T(1,128)S(1)}', space=vmem, size = 0x200, scoped, tag = 'scoped memory for trynet_forward.3']
  %s0 = inlined_call_operand.vmem [shape: f32[256,50], index: 0, kind: input, shape index: {}]
  %s1 = inlined_call_operand.vmem [shape: f32[50,1], index: 1, kind: input, shape index: {}]
  %s2 = inlined_call_operand.<no memory space> [shape: f32[1,1], index: 2, kind: input, shape index: {}]
  %s3 = inlined_call_operand.vmem [shape: f32[256,1], index: 3, kind: output, shape index: {}]
  %s4 = sld [smem:[#allocation0]]
  $region45: #{trynet_forward.3} parent=0
    _
  %s6 = ssub.s32 1, %s4
  %s7 = scalar_select 0, %s6, %s4
  %v8 = vstv %s2
  %9 = vst [vmem:[#allocation2] sm:$0x1] %v8
  loop: start=0, step=1, limit=6
  $region2: #{trynet_forward.3} parent=0 // loop_pre_header
    _
  $region3: #{trynet_forward.3} parent=0 // loop_header
    %s11 = sphi 0, %s15
    %p12 = scmp.ge.s32.totalorder %s11, 6
    %s21 = sphi 0, %s23
    %s24 = sphi 0, %s21
    %s25 = sphi 0, %s24
    %s41 = sphi 0, %s25
    %s45 = sphi 0, %s45
    %s47 = sphi 0, %s45
    %s48 = sphi 0, %s47
    %s62 = sphi 0, %s48
    %s66 = sphi 0, %s66
    %s68 = sphi 0, %s66
    %s69 = sphi 0, %s68
    %s83 = sphi 0, %s69
    %s89 = sphi 0, %s91
    %s92 = sphi 0, %s89
    %s93 = sphi 0, %s92
    %s109 = sphi 0, %s93
  $region4: #{trynet_forward.3} parent=0 // loop_header_branch
    %14 = sbr.rel (%p12) target = $region8
  $region5: #{trynet_forward.3} parent=0 // loop_body
    %s16 = ssub.s32 %s11, 1
    %s17 = ssub.s32 %s11, 2
    %s18 = sadd.s32 %s11, 1
    %s19 = ssub.s32 %s11, %s18
    %p20 = scmp.eq.s32.totalorder %s19, 0
    %s22 = sadd.s32 %s21, 1
    %s23 = scalar_select %p20, %s21, %s22
    %p26 = pneg %p20
    %p27 = scmp.eq.s32.totalorder %s11, 3
    %p28 = por %p26, %p27
    %p29 = scmp.ne.s32.totalorder %s21, %s24
    %p30 = scmp.eq.s32.totalorder %s11, 0
    %p31 = por %p29, %p30
    %p32 = scmp.ne.s32.totalorder %s21, %s24
    %p33 = scmp.eq.s32.totalorder %s16, 3
    %p34 = por %p32, %p33
    %p35 = scmp.ne.s32.totalorder %s24, %s25
    %p36 = scmp.eq.s32.totalorder %s16, 0
    %p37 = por %p35, %p36
    %p38 = scmp.ne.s32.totalorder %s24, %s25
    %p39 = scmp.eq.s32.totalorder %s17, 3
    %p40 = por %p38, %p39
    %p42 = scmp.ne.s32.totalorder %s25, %s41
    %p43 = scmp.eq.s32.totalorder %s17, 0
    %p44 = por %p42, %p43
    %s46 = sadd.s32 %s45, 1
    %p49 = scmp.eq.s32.totalorder %s11, 3
    %p50 = scmp.ne.s32.totalorder %s45, %s47
    %p51 = scmp.eq.s32.totalorder %s11, 0
    %p52 = por %p50, %p51
    %p53 = scmp.ne.s32.totalorder %s45, %s47
    %p54 = scmp.eq.s32.totalorder %s16, 3
    %p55 = por %p53, %p54
    %p56 = scmp.ne.s32.totalorder %s47, %s48
    %p57 = scmp.eq.s32.totalorder %s16, 0
    %p58 = por %p56, %p57
    %p59 = scmp.ne.s32.totalorder %s47, %s48
    %p60 = scmp.eq.s32.totalorder %s17, 3
    %p61 = por %p59, %p60
    %p63 = scmp.ne.s32.totalorder %s48, %s62
    %p64 = scmp.eq.s32.totalorder %s17, 0
    %p65 = por %p63, %p64
    %s67 = sadd.s32 %s66, 1
    %p70 = scmp.eq.s32.totalorder %s11, 3
    %p71 = scmp.ne.s32.totalorder %s66, %s68
    %p72 = scmp.eq.s32.totalorder %s11, 0
    %p73 = por %p71, %p72
    %p74 = scmp.ne.s32.totalorder %s66, %s68
    %p75 = scmp.eq.s32.totalorder %s16, 3
    %p76 = por %p74, %p75
    %p77 = scmp.ne.s32.totalorder %s68, %s69
    %p78 = scmp.eq.s32.totalorder %s16, 0
    %p79 = por %p77, %p78
    %p80 = scmp.ne.s32.totalorder %s68, %s69
    %p81 = scmp.eq.s32.totalorder %s17, 3
    %p82 = por %p80, %p81
    %p84 = scmp.ne.s32.totalorder %s69, %s83
    %p85 = scmp.eq.s32.totalorder %s17, 0
    %p86 = por %p84, %p85
    %s87 = ssub.s32 %s11, %s18
    %p88 = scmp.eq.s32.totalorder %s87, 0
    %s90 = sadd.s32 %s89, 1
    %s91 = scalar_select %p88, %s89, %s90
    %p94 = pneg %p88
    %p95 = scmp.eq.s32.totalorder %s11, 3
    %p96 = por %p94, %p95
    %p97 = scmp.ne.s32.totalorder %s89, %s92
    %p98 = scmp.eq.s32.totalorder %s11, 0
    %p99 = por %p97, %p98
    %p100 = scmp.ne.s32.totalorder %s89, %s92
    %p101 = scmp.eq.s32.totalorder %s16, 3
    %p102 = por %p100, %p101
    %p103 = scmp.ne.s32.totalorder %s92, %s93
    %p104 = scmp.eq.s32.totalorder %s16, 0
    %p105 = por %p103, %p104
    %p106 = scmp.ne.s32.totalorder %s92, %s93
    %p107 = scmp.eq.s32.totalorder %s17, 3
    %p108 = por %p106, %p107
    %p110 = scmp.ne.s32.totalorder %s93, %s109
    %p111 = scmp.eq.s32.totalorder %s17, 0
    %p112 = por %p110, %p111
    %p113 = scmp.le.s32.totalorder 1, %s11
    %p114 = scmp.lt.s32.totalorder %s11, 5
    %p115 = pnand %p113, %p114
    %p116 = pneg %p115
    // Predicated region
    $region9: #{trynet_forward.3} parent=5 // pred_check
      _
    $region10: #{trynet_forward.3} parent=5 // pred_check_branch
      %118 = sbr.rel (%p115) target = $region12
    $region11: #{trynet_forward.3} parent=5 // pred_region
      %s119 = ssub.s32 %s11, 1
      // Predicated region
      $region13: #{trynet_forward.3} parent=11 // pred_check
        %p120 = pneg %p58
      $region14: #{trynet_forward.3} parent=11 // pred_check_branch
        %122 = sbr.rel (%p120) target = $region16
      $region15: #{trynet_forward.3} parent=11 // pred_region
        _
      $region16: #{trynet_forward.3} parent=11 // pred_fallthru
        _
      // Predicated region
      $region17: #{trynet_forward.3} parent=11 // pred_check
        %p123 = pneg %p79
      $region18: #{trynet_forward.3} parent=11 // pred_check_branch
        %125 = sbr.rel (%p123) target = $region20
      $region19: #{trynet_forward.3} parent=11 // pred_region
        _
      $region20: #{trynet_forward.3} parent=11 // pred_fallthru
        _
    $region12: #{trynet_forward.3} parent=5 // pred_fallthru
      _
    %p126 = scmp.lt.s32.totalorder %s11, 4
    // Predicated region
    $region21: #{trynet_forward.3} parent=5 // pred_check
      %p127 = pneg %p126
    $region22: #{trynet_forward.3} parent=5 // pred_check_branch
      %129 = sbr.rel (%p127) target = $region24
    $region23: #{trynet_forward.3} parent=5 // pred_region
      // Predicated region
      $region25: #{trynet_forward.3} parent=23 // pred_check
        %p130 = pneg %p31
      $region26: #{trynet_forward.3} parent=23 // pred_check_branch
        %132 = sbr.rel (%p130) target = $region28
      $region27: #{trynet_forward.3} parent=23 // pred_region
        %s133 = smul.u32 8, %s11
        %p134 = scmp.lt.s32.totalorder %s133, 31
        %s135 = scalar_select %p134, %s133, 31
        %s136 = smul.addr %s135, 8
        %s137 = scalar_lea.vmem %s0, %s136
        %s138 = smul.u32 8, %s11
      $region28: #{trynet_forward.3} parent=23 // pred_fallthru
        _
    $region24: #{trynet_forward.3} parent=5 // pred_fallthru
      _
    %p139 = scmp.le.s32.totalorder 1, %s11
    %p140 = scmp.lt.s32.totalorder %s11, 5
    %p141 = pnand %p139, %p140
    %p142 = pneg %p141
    // Predicated region
    $region29: #{trynet_forward.3} parent=5 // pred_check
      _
    $region30: #{trynet_forward.3} parent=5 // pred_check_branch
      %144 = sbr.rel (%p141) target = $region32
    $region31: #{trynet_forward.3} parent=5 // pred_region
      %s145 = ssub.s32 %s11, 1
      %s146 = smul.u32 8, %s16
      %p147 = scmp.lt.s32.totalorder %s146, 31
      %s148 = scalar_select %p147, %s146, 31
      %s149 = smul.addr %s148, 8
      %s150 = scalar_lea.vmem %s0, %s149
      %p151 = pneg %p37
      %p152 = pneg %p34
      %p153 = pneg %p58
      %p154 = pneg %p55
      %p155 = pneg %p79
      %p156 = pneg %p76
      %p157 = pneg %p105
      %p158 = pneg %p102
      %s159 = smul.u32 8, %s16
      %p160 = scmp.lt.s32.totalorder %s159, 31
      %s161 = scalar_select %p160, %s159, 31
      %s162 = smul.addr %s161, 8
      %s163 = scalar_lea.vmem %s3, %s162
      %s164 = smul.u32 8, %s16
      %p165 = scmp.lt.s32.totalorder %s164, 31
      %s166 = scalar_select %p165, %s164, 31
      %s167 = smul.addr %s166, 8
      %s168 = scalar_lea.vmem %s0, %s167
      %s169 = smul.u32 8, %s16
      %s170 = smul.u32 8, %s16
      %p171 = scmp.lt.s32.totalorder %s170, 31
      %s172 = scalar_select %p171, %s170, 31
      %s173 = smul.addr %s172, 8
      %s174 = scalar_lea.vmem %s3, %s173
      %s175 = smul.u32 8, %s16
      %v176 = vld [vmem:[%s168] sm:$0xff]
      %v177 = vld [vmem:[%s168 + $0x8] sm:$0xff]
      %v178 = vld [vmem:[%s168 + $0x10] sm:$0xff]
      %v179 = vld [vmem:[%s168 + $0x18] sm:$0xff]
      %v180 = vld [vmem:[%s168 + $0x20] sm:$0xff]
      %v181 = vld [vmem:[%s168 + $0x28] sm:$0xff]
      %v182 = vld [vmem:[%s168 + $0x30] sm:$0xff]
      %v183 = vld [vmem:[%s168 + $0x38] sm:$0xff]
      %v184 = vld [vmem:[%s1] sm:$0xff]
      %v185 = vld [vmem:[%s1 + $0x8] sm:$0xff]
      %v186 = vld [vmem:[%s1 + $0x10] sm:$0xff]
      %v187 = vld [vmem:[%s1 + $0x18] sm:$0xff]
      %v188 = vld [vmem:[%s1 + $0x20] sm:$0xff]
      %v189 = vld [vmem:[%s1 + $0x28] sm:$0xff]
      %v190 = vld [vmem:[%s1 + $0x30] sm:$0x3]
      %v191 = vld [vmem:[#allocation2] sm:$0x1]
      %v193 = vlaneseq
      %v194 = vshrl.u32 %v193, 7
      %v195 = vsub.s32 0, %v194
      %v196 = vrot.slane %v191, %v195
      %vm198 = vcmask 408576
      %v200 = vsel %vm198, %v176, 0
      %v203 = vsel %vm198, %v177, 0
      %v206 = vsel %vm198, %v178, 0
      %v209 = vsel %vm198, %v179, 0
      %v212 = vsel %vm198, %v180, 0
      %v215 = vsel %vm198, %v181, 0
      %v218 = vsel %vm198, %v182, 0
      %v221 = vsel %vm198, %v183, 0
      %vm223 = vcmask 1041408
      %v225 = vsel %vm223, %v190, 0
      %227 = vmatprep.subr.mxu0 0.0
      %228 = vmatpush1.msra.mxu0 %v184
      %229 = vmatprep.subr.mxu0 0.0
      %230 = vmatpush1.msra.mxu0 %v185
      %231 = vmatprep.subr.mxu0 0.0
      %232 = vmatpush1.msra.mxu0 %v186
      %233 = vmatprep.subr.mxu0 0.0
      %234 = vmatpush1.msra.mxu0 %v187
      %235 = vmatprep.subr.mxu0 0.0
      %236 = vmatpush1.msra.mxu0 %v188
      %237 = vmatprep.subr.mxu0 0.0
      %238 = vmatpush1.msra.mxu0 %v189
      %239 = vmatprep.subr.mxu0 0.0
      %240 = vmatpush1.msra.mxu0 %v225
      %241 = vmatprep.subr.mxu0 0.0
      %242 = vmatpush1.msra.mxu0 0.0
      %243 = vmatprep.subr.mxu0 0.0
      %244 = vmatpush1.msra.mxu0 0.0
      %245 = vmatprep.subr.mxu0 0.0
      %246 = vmatpush1.msra.mxu0 0.0
      %247 = vmatprep.subr.mxu0 0.0
      %248 = vmatpush1.msra.mxu0 0.0
      %249 = vmatprep.subr.mxu0 0.0
      %250 = vmatpush1.msra.mxu0 0.0
      %251 = vmatprep.subr.mxu0 0.0
      %252 = vmatpush1.msra.mxu0 0.0
      %253 = vmatprep.subr.mxu0 0.0
      %254 = vmatpush1.msra.mxu0 0.0
      %255 = vmatprep.subr.mxu0 0.0
      %256 = vmatpush1.msra.mxu0 0.0
      %257 = vmatprep.subr.mxu0 0.0
      %258 = vmatpush1.msra.mxu0 0.0
      %259 = vmatprep.subr.mxu0 0.0
      %260 = vmatpush1.msra.mxu0 0.0
      %261 = vmatprep.subr.mxu0 0.0
      %262 = vmatpush1.msra.mxu0 0.0
      %263 = vmatprep.subr.mxu0 0.0
      %264 = vmatpush1.msra.mxu0 0.0
      %265 = vmatprep.subr.mxu0 0.0
      %266 = vmatpush1.msra.mxu0 0.0
      %267 = vmatprep.subr.mxu0 0.0
      %268 = vmatpush1.msra.mxu0 0.0
      %269 = vmatprep.subr.mxu0 0.0
      %270 = vmatpush1.msra.mxu0 0.0
      %271 = vmatprep.subr.mxu0 0.0
      %272 = vmatpush1.msra.mxu0 0.0
      %273 = vmatprep.subr.mxu0 0.0
      %274 = vmatpush1.msra.mxu0 0.0
      %275 = vmatprep.subr.mxu0 0.0
      %276 = vmatpush1.msra.mxu0 0.0
      %277 = vmatprep.subr.mxu0 0.0
      %278 = vmatpush1.msra.mxu0 0.0
      %279 = vmatprep.subr.mxu0 0.0
      %280 = vmatpush1.msra.mxu0 0.0
      %281 = vmatprep.subr.mxu0 0.0
      %282 = vmatpush1.msra.mxu0 0.0
      %283 = vmatprep.subr.mxu0 0.0
      %284 = vmatpush1.msra.mxu0 0.0
      %285 = vmatprep.subr.mxu0 0.0
      %286 = vmatpush1.msra.mxu0 0.0
      %287 = vmatprep.subr.mxu0 0.0
      %288 = vmatpush1.msra.mxu0 0.0
      %289 = vmatprep.subr.mxu0 0.0
      %290 = vmatpush1.msra.mxu0 0.0
      %291 = vmatprep.mubr.f32.mxu0 0.0
      %292 = vmatmul.mubr.f32.gmra.mrb[0].mxu0 %v200
      %v293 = vpop.f32.mrb[0].mxu0
      %v294 = vadd.f32 %v196, %v293
      %v295 = vpop.f32.mrb[0].mxu0
      %296 = vmatprep.mubr.f32.mxu0 0.0
      %297 = vmatmul.mubr.f32.gmra.mrb[0].mxu0 %v203
      %v298 = vpop.f32.mrb[0].mxu0
      %v299 = vadd.f32 %v196, %v298
      %v300 = vpop.f32.mrb[0].mxu0
      %301 = vmatprep.mubr.f32.mxu0 0.0
      %302 = vmatmul.mubr.f32.gmra.mrb[0].mxu0 %v206
      %v303 = vpop.f32.mrb[0].mxu0
      %v304 = vadd.f32 %v196, %v303
      %v305 = vpop.f32.mrb[0].mxu0
      %306 = vmatprep.mubr.f32.mxu0 0.0
      %307 = vmatmul.mubr.f32.gmra.mrb[0].mxu0 %v209
      %v308 = vpop.f32.mrb[0].mxu0
      %v309 = vadd.f32 %v196, %v308
      %v310 = vpop.f32.mrb[0].mxu0
      %311 = vmatprep.mubr.f32.mxu0 0.0
      %312 = vmatmul.mubr.f32.gmra.mrb[0].mxu0 %v212
      %v313 = vpop.f32.mrb[0].mxu0
      %v314 = vadd.f32 %v196, %v313
      %v315 = vpop.f32.mrb[0].mxu0
      %316 = vmatprep.mubr.f32.mxu0 0.0
      %317 = vmatmul.mubr.f32.gmra.mrb[0].mxu0 %v215
      %v318 = vpop.f32.mrb[0].mxu0
      %v319 = vadd.f32 %v196, %v318
      %v320 = vpop.f32.mrb[0].mxu0
      %321 = vmatprep.mubr.f32.mxu0 0.0
      %322 = vmatmul.mubr.f32.gmra.mrb[0].mxu0 %v218
      %v323 = vpop.f32.mrb[0].mxu0
      %v324 = vadd.f32 %v196, %v323
      %v325 = vpop.f32.mrb[0].mxu0
      %326 = vmatprep.mubr.f32.mxu0 0.0
      %327 = vmatmul.mubr.f32.gmra.mrb[0].mxu0 %v221
      %v328 = vpop.f32.mrb[0].mxu0
      %v329 = vadd.f32 %v196, %v328
      %v330 = vpop.f32.mrb[0].mxu0
      %331 = vdwg.mxu0
      %vm332 = vcmask 7168
      %333 = vst.msk [vmem:[%s174] sm:$0xff] %vm332, %v294
      %334 = vst.msk [vmem:[%s174 + $0x8] sm:$0xff] %vm332, %v299
      %335 = vst.msk [vmem:[%s174 + $0x10] sm:$0xff] %vm332, %v304
      %336 = vst.msk [vmem:[%s174 + $0x18] sm:$0xff] %vm332, %v309
      %337 = vst.msk [vmem:[%s174 + $0x20] sm:$0xff] %vm332, %v314
      %338 = vst.msk [vmem:[%s174 + $0x28] sm:$0xff] %vm332, %v319
      %339 = vst.msk [vmem:[%s174 + $0x30] sm:$0xff] %vm332, %v324
      %340 = vst.msk [vmem:[%s174 + $0x38] sm:$0xff] %vm332, %v329
      %s341 = smul.u32 8, %s16
      %p342 = scmp.lt.s32.totalorder %s341, 31
      %s343 = scalar_select %p342, %s341, 31
      %s344 = smul.addr %s343, 8
      %s345 = scalar_lea.vmem %s3, %s344
      // Predicated region
      $region33: #{trynet_forward.3} parent=31 // pred_check
        %p346 = pneg %p102
      $region34: #{trynet_forward.3} parent=31 // pred_check_branch
        %348 = sbr.rel (%p346) target = $region36
      $region35: #{trynet_forward.3} parent=31 // pred_region
        %s349 = smul.u32 8, %s16
      $region36: #{trynet_forward.3} parent=31 // pred_fallthru
        _
    $region32: #{trynet_forward.3} parent=5 // pred_fallthru
      _
    %p350 = scmp.le.s32.totalorder 2, %s11
    // Predicated region
    $region37: #{trynet_forward.3} parent=5 // pred_check
      %p351 = pneg %p350
    $region38: #{trynet_forward.3} parent=5 // pred_check_branch
      %353 = sbr.rel (%p351) target = $region40
    $region39: #{trynet_forward.3} parent=5 // pred_region
      %s354 = ssub.s32 %s11, 2
      // Predicated region
      $region41: #{trynet_forward.3} parent=39 // pred_check
        %p355 = pneg %p108
      $region42: #{trynet_forward.3} parent=39 // pred_check_branch
        %357 = sbr.rel (%p355) target = $region44
      $region43: #{trynet_forward.3} parent=39 // pred_region
        %s358 = smul.u32 8, %s17
        %p359 = scmp.lt.s32.totalorder %s358, 31
        %s360 = scalar_select %p359, %s358, 31
        %s361 = smul.addr %s360, 8
        %s362 = scalar_lea.vmem %s3, %s361
      $region44: #{trynet_forward.3} parent=39 // pred_fallthru
        _
    $region40: #{trynet_forward.3} parent=5 // pred_fallthru
      _
  $region6: #{trynet_forward.3} parent=0 // loop_footer
    %s15 = sadd.s32 1, %s11
  $region7: #{trynet_forward.3} parent=0 // loop_footer_branch
    %10 = sbr.rel target = $region3
  $region8: #{trynet_forward.3} parent=0 // loop_exit
    _

</llo_original>
